<compile_context>
chip_gen: v5e
topology: v5e:2x2
jax: 0.10.0
libtpu: 0.0.40
codegen_flags: <defaults>
</compile_context>

<pallas_src>
import functools
import itertools

import jax
import jax.numpy as jnp
from jax.experimental import pallas as pl
from jax.experimental.pallas import tpu as pltpu


def _round_up(x, m):
    return (x + m - 1) // m * m


def _cdiv(a, b):
    return -(-a // b)


def _choose_tiles(B, T, n_est, n_act):
    """Pick (batch_block Bb, padded_B, time_chunk Tc, padded_T)."""
    # Time chunk: <= ~2048 lanes, multiple of 128, minimal zero padding.
    t_target = 2048
    if T <= t_target:
        tc = _round_up(T, 128)
        t_pad = tc
    else:
        n_chunks = _cdiv(T, t_target)
        tc = _round_up(_cdiv(T, n_chunks), 128)
        t_pad = tc * n_chunks
    # Batch block: multiple of 8 (dense sublanes for the (Bb, Tc) slabs), sized so
    # the double-buffered input tiles stay well under the scoped VMEM limit on
    # every generation (v7x only has 64 MiB physical VMEM).
    padded_rows = _round_up(n_est, 8) + _round_up(n_act, 8)  # VMEM sublane padding
    vmem_budget = 16 * 1024 * 1024
    bb = max(8, (vmem_budget // (2 * padded_rows * tc * 4)) // 8 * 8)
    bb = min(bb, _round_up(B, 8))
    # Keep >= 2 batch grid steps when possible so both v7x TensorCores get work.
    if _round_up(B, 8) > 8:
        bb = min(bb, max(8, _round_up(_cdiv(B, 2), 8)))
    b_pad = _round_up(B, bb)
    return bb, b_pad, tc, t_pad


# ------------------------------ Pallas kernel ------------------------------ #
def _pairwise_sisnr_kernel(pr_ref, t_ref, out_ref,
                           cross_acc, prpow_acc, tpow_acc, prsum_acc, tsum_acc,
                           *, n_est, n_act, t_len, zero_mean, eps):
    # pr_ref : (Bb, n_est, Tc)  VMEM tile
    # t_ref  : (Bb, n_act, Tc)  VMEM tile
    # out_ref: (Bb, n_est*n_act) flattened pairwise SI-SNR (written on last chunk)
    k = pl.program_id(1)

    @pl.when(k == 0)
    def _init():
        cross_acc[...] = jnp.zeros_like(cross_acc)
        prpow_acc[...] = jnp.zeros_like(prpow_acc)
        tpow_acc[...] = jnp.zeros_like(tpow_acc)
        if zero_mean:
            prsum_acc[...] = jnp.zeros_like(prsum_acc)
            tsum_acc[...] = jnp.zeros_like(tsum_acc)

    # Accumulate sufficient statistics for this time chunk.
    # Each per-source slab is a dense (Bb, Tc) tile: VPU multiply + lane reduce,
    # full f32 accumulation (no MXU).
    cross_cols, prpow_cols, prsum_cols = [], [], []
    for i in range(n_est):
        p = pr_ref[:, i, :].astype(jnp.float32)            # (Bb, Tc)
        prpow_cols.append(jnp.sum(p * p, axis=-1, keepdims=True))
        if zero_mean:
            prsum_cols.append(jnp.sum(p, axis=-1, keepdims=True))
        for j in range(n_act):
            tj = t_ref[:, j, :].astype(jnp.float32)        # (Bb, Tc)
            cross_cols.append(jnp.sum(p * tj, axis=-1, keepdims=True))

    tpow_cols, tsum_cols = [], []
    for j in range(n_act):
        tj = t_ref[:, j, :].astype(jnp.float32)
        tpow_cols.append(jnp.sum(tj * tj, axis=-1, keepdims=True))
        if zero_mean:
            tsum_cols.append(jnp.sum(tj, axis=-1, keepdims=True))

    cross_acc[...] += jnp.concatenate(cross_cols, axis=-1)
    prpow_acc[...] += jnp.concatenate(prpow_cols, axis=-1)
    tpow_acc[...] += jnp.concatenate(tpow_cols, axis=-1)
    if zero_mean:
        prsum_acc[...] += jnp.concatenate(prsum_cols, axis=-1)
        tsum_acc[...] += jnp.concatenate(tsum_cols, axis=-1)

    # Finalize: stabilized SI-SNR from the accumulated statistics.
    @pl.when(k == pl.num_programs(1) - 1)
    def _finalize():
        cross = cross_acc[...]          # (Bb, n_est*n_act)
        prpow = prpow_acc[...]          # (Bb, n_est)
        tpow = tpow_acc[...]            # (Bb, n_act)
        if zero_mean:
            prsum = prsum_acc[...]
            tsum = tsum_acc[...]
            inv_len = jnp.float32(1.0 / t_len)
        cols = []
        for i in range(n_est):
            pp = prpow[:, i:i + 1]
            if zero_mean:
                ps = prsum[:, i:i + 1]
                pp = pp - ps * ps * inv_len
            for j in range(n_act):
                c = cross[:, i * n_act + j:i * n_act + j + 1]
                tp = tpow[:, j:j + 1]
                if zero_mean:
                    ts = tsum[:, j:j + 1]
                    c = c - ps * ts * inv_len
                    tp = tp - ts * ts * inv_len
                rho_sq = (c * c) / (pp * tp + eps)
                cols.append(10.0 * jnp.log10((rho_sq + eps) / (1.0 - rho_sq + eps)))
        out_ref[...] = jnp.concatenate(cols, axis=-1).astype(out_ref.dtype)


def pairwise_stabilized_sisnr(pr_batch, t_batch, *, zero_mean=False, eps=1e-9):
    """Returns the stabilized SI-SNR matrix of shape (B, n_est, n_act)."""
    B, n_est, T = pr_batch.shape
    Bt, n_act, Tt = t_batch.shape
    assert B == Bt and T == Tt

    bb, b_pad, tc, t_pad = _choose_tiles(B, T, n_est, n_act)

    pr = pr_batch.astype(jnp.float32)
    tt = t_batch.astype(jnp.float32)
    if b_pad != B or t_pad != T:
        # Zero padding is neutral for the accumulated sum / power / cross stats;
        # zero_mean centering uses the true length T inside the kernel.
        pr = jnp.pad(pr, ((0, b_pad - B), (0, 0), (0, t_pad - T)))
        tt = jnp.pad(tt, ((0, b_pad - B), (0, 0), (0, t_pad - T)))

    grid = (b_pad // bb, t_pad // tc)
    n_pair = n_est * n_act

    kernel = functools.partial(
        _pairwise_sisnr_kernel,
        n_est=n_est, n_act=n_act, t_len=T, zero_mean=zero_mean, eps=eps)

    cost = pl.CostEstimate(
        flops=2 * B * T * (n_est * n_act + n_est + n_act),
        transcendentals=B * n_pair,
        bytes_accessed=4 * (B * T * (n_est + n_act) + B * n_pair))

    out = pl.pallas_call(
        kernel,
        out_shape=jax.ShapeDtypeStruct((b_pad, n_pair), jnp.float32),
        grid_spec=pltpu.PrefetchScalarGridSpec(
            num_scalar_prefetch=0,
            grid=grid,
            in_specs=[
                pl.BlockSpec((bb, n_est, tc), lambda b, k: (b, 0, k)),
                pl.BlockSpec((bb, n_act, tc), lambda b, k: (b, 0, k)),
            ],
            out_specs=pl.BlockSpec((bb, n_pair), lambda b, k: (b, 0)),
            scratch_shapes=[
                pltpu.VMEM((bb, n_pair), jnp.float32),   # cross
                pltpu.VMEM((bb, n_est), jnp.float32),    # pr power
                pltpu.VMEM((bb, n_act), jnp.float32),    # t power
                pltpu.VMEM((bb, n_est), jnp.float32),    # pr sum (zero_mean)
                pltpu.VMEM((bb, n_act), jnp.float32),    # t sum  (zero_mean)
            ],
        ),
        compiler_params=pltpu.CompilerParams(
            dimension_semantics=("parallel", "arbitrary"),
            vmem_limit_bytes=40 * 1024 * 1024),
        cost_estimate=cost,
    )(pr, tt)

    return out[:B].reshape(B, n_est, n_act)


# ------------------------ forward-equivalent wrapper ----------------------- #
def stabilized_perm_inv_sisdr(pr_batch, t_batch, *,
                              n_estimated_sources, n_actual_sources,
                              zero_mean=False, backward_loss=True,
                              return_individual_results=False,
                              eps=1e-9, return_best_permutation=False):
    # TODO(synk): improvement=True / single_source=True / initial_mixtures paths
    # of the reference module are not implemented (defaults are False/None).
    assert n_estimated_sources >= n_actual_sources
    assert pr_batch.shape[1] == n_estimated_sources
    assert t_batch.shape[1] == n_actual_sources

    perms = list(itertools.permutations(range(n_estimated_sources),
                                        n_actual_sources))
    perm_arr = jnp.asarray(perms, dtype=jnp.int32)          # (n_perms, n_act)

    # Hot path (all time-axis work) runs in the Pallas kernel.
    sisnr_all = pairwise_stabilized_sisnr(
        pr_batch, t_batch, zero_mean=zero_mean, eps=eps)    # (B, n_est, n_act)

    # Tiny permutation scoring in plain JAX.
    j_idx = jnp.arange(n_actual_sources, dtype=jnp.int32)
    gathered = sisnr_all[:, perm_arr, j_idx[None, :]]       # (B, n_perms, n_act)
    scores = gathered.mean(axis=-1)                         # (B, n_perms)

    best_sisdr = scores.max(axis=-1)                        # (B,)
    best_perm_ind = jnp.argmax(scores, axis=-1)             # (B,)

    if not return_individual_results:
        best_sisdr = best_sisdr.mean()
    if backward_loss:
        best_sisdr = -best_sisdr

    if return_best_permutation:
        return best_sisdr, perm_arr[best_perm_ind]
    return best_sisdr


# --------------------------------- reference -------------------------------- #
def _ref_loss(pr, t, *, n_est, n_act, zero_mean=False, eps=1e-9):
    """Pure-JAX transcription of the PyTorch module (default flags)."""
    if zero_mean:
        pr = pr - pr.mean(-1, keepdims=True)
        t = t - t.mean(-1, keepdims=True)
    t_pow = jnp.sum(t * t, axis=-1, keepdims=True)
    sisnr_l = []
    for perm in itertools.permutations(range(n_est), n_act):
        ppr = pr[:, list(perm), :]
        pr_pow = jnp.sum(ppr * ppr, axis=-1, keepdims=True)
        inner_sq = jnp.sum(ppr * t, axis=-1, keepdims=True) ** 2
        rho_sq = inner_sq / (pr_pow * t_pow + eps)
        sisnr_l.append(10.0 * jnp.log10((rho_sq + eps) / (1.0 - rho_sq + eps)))
    all_sisnrs = jnp.concatenate(sisnr_l, axis=-1)          # (B, n_act, n_perms)
    scores = all_sisnrs.mean(-2)                            # (B, n_perms)
    best = scores.max(-1)                                   # (B,)
    return -best.mean()                                     # backward_loss=True


# ----------------------------------- main ----------------------------------- #
if __name__ == "__main__":
    key = jax.random.PRNGKey(0)
    k1, k2, k3, k4 = jax.random.split(key, 4)

    # Case 1: module defaults (zero_mean=False), single time chunk.
    B, N_EST, N_ACT, T = 4, 3, 2, 512
    pr1 = jax.random.normal(k1, (B, N_EST, T), dtype=jnp.float32)
    t1 = jax.random.normal(k2, (B, N_ACT, T), dtype=jnp.float32)
    loss1 = jax.block_until_ready(stabilized_perm_inv_sisdr(
        pr1, t1, n_estimated_sources=N_EST, n_actual_sources=N_ACT,
        zero_mean=False, backward_loss=True,
        return_individual_results=False, eps=1e-9))
    ref1 = jax.block_until_ready(
        _ref_loss(pr1, t1, n_est=N_EST, n_act=N_ACT, zero_mean=False))
    assert jnp.allclose(loss1, ref1, rtol=1e-4, atol=1e-4), (loss1, ref1)

    # Case 2: zero_mean=True, multi-chunk time reduction + batch padding path.
    B2, N_EST2, N_ACT2, T2 = 3, 3, 3, 4608
    pr2 = 0.1 + jax.random.normal(k3, (B2, N_EST2, T2), dtype=jnp.float32)
    t2 = -0.1 + jax.random.normal(k4, (B2, N_ACT2, T2), dtype=jnp.float32)
    loss2, best_perm = stabilized_perm_inv_sisdr(
        pr2, t2, n_estimated_sources=N_EST2, n_actual_sources=N_ACT2,
        zero_mean=True, backward_loss=True, eps=1e-9,
        return_best_permutation=True)
    loss2 = jax.block_until_ready(loss2)
    _ = jax.block_until_ready(best_perm)
    ref2 = jax.block_until_ready(
        _ref_loss(pr2, t2, n_est=N_EST2, n_act=N_ACT2, zero_mean=True))
    assert jnp.allclose(loss2, ref2, rtol=1e-3, atol=1e-3), (loss2, ref2)

    print("KERNEL_OK")
</pallas_src>

<mosaic_0001>
module attributes {stable_mosaic.version = 11 : i64} {
  func.func @_pairwise_sisnr_kernel(%arg0: i32, %arg1: i32, %arg2: memref<8x3x512xf32, #tpu.memory_space<vmem>>, %arg3: memref<8x2x512xf32, #tpu.memory_space<vmem>>, %arg4: memref<8x6xf32, #tpu.memory_space<vmem>>, %arg5: memref<8x6xf32, #tpu.memory_space<vmem>>, %arg6: memref<8x3xf32, #tpu.memory_space<vmem>>, %arg7: memref<8x2xf32, #tpu.memory_space<vmem>>, %arg8: memref<8x3xf32, #tpu.memory_space<vmem>>, %arg9: memref<8x2xf32, #tpu.memory_space<vmem>>) attributes {dimension_semantics = [#tpu.dimension_semantics<parallel>, #tpu.dimension_semantics<arbitrary>], iteration_bounds = array<i64: 1, 1>, scalar_prefetch = 0 : i64, scratch_operands = 5 : i64, tpu.core_type = #tpu.core_type<tc>, window_params = [{transform_indices = @transform_0, window_bounds = array<i64: 8, 3, 512>}, {transform_indices = @transform_1, window_bounds = array<i64: 8, 2, 512>}, {transform_indices = @transform_2, window_bounds = array<i64: 8, 6>}]} {
    %c0_i32 = arith.constant 0 : i32
    %0 = arith.cmpi eq, %arg1, %c0_i32 : i32
    %1 = arith.extui %0 : i1 to i32
    %c0_i32_0 = arith.constant 0 : i32
    %2 = arith.cmpi ne, %1, %c0_i32_0 : i32
    scf.if %2 {
      %cst_55 = arith.constant 0.000000e+00 : f32
      %73 = vector.broadcast %cst_55 : f32 to vector<8x6xf32>
      %c0_56 = arith.constant 0 : index
      %c0_57 = arith.constant 0 : index
      %74 = vector.load %arg5[%c0_56, %c0_57] : memref<8x6xf32, #tpu.memory_space<vmem>>, vector<8x6xf32>
      tpu.vector_store %arg5[%c0_56, %c0_57], %73 {strides = array<i32>} : memref<8x6xf32, #tpu.memory_space<vmem>>, vector<8x6xf32>,
      %cst_58 = arith.constant 0.000000e+00 : f32
      %75 = vector.broadcast %cst_58 : f32 to vector<8x3xf32>
      %c0_59 = arith.constant 0 : index
      %c0_60 = arith.constant 0 : index
      %76 = vector.load %arg6[%c0_59, %c0_60] : memref<8x3xf32, #tpu.memory_space<vmem>>, vector<8x3xf32>
      tpu.vector_store %arg6[%c0_59, %c0_60], %75 {strides = array<i32>} : memref<8x3xf32, #tpu.memory_space<vmem>>, vector<8x3xf32>,
      %cst_61 = arith.constant 0.000000e+00 : f32
      %77 = vector.broadcast %cst_61 : f32 to vector<8x2xf32>
      %c0_62 = arith.constant 0 : index
      %c0_63 = arith.constant 0 : index
      %78 = vector.load %arg7[%c0_62, %c0_63] : memref<8x2xf32, #tpu.memory_space<vmem>>, vector<8x2xf32>
      tpu.vector_store %arg7[%c0_62, %c0_63], %77 {strides = array<i32>} : memref<8x2xf32, #tpu.memory_space<vmem>>, vector<8x2xf32>,
    } else {
    }
    %c0 = arith.constant 0 : index
    %c0_1 = arith.constant 0 : index
    %c0_2 = arith.constant 0 : index
    %3 = vector.load %arg2[%c0, %c0_1, %c0_2] : memref<8x3x512xf32, #tpu.memory_space<vmem>>, vector<8x1x512xf32>
    %4 = vector.shape_cast %3 : vector<8x1x512xf32> to vector<8x512xf32>
    %5 = arith.mulf %4, %4 : vector<8x512xf32>
    %cst = arith.constant dense<0.000000e+00> : vector<8xf32>
    %6 = vector.multi_reduction <add>, %5, %cst [1] : vector<8x512xf32> to vector<8xf32>
    %7 = vector.shape_cast %6 : vector<8xf32> to vector<8x1xf32>
    %c0_3 = arith.constant 0 : index
    %c0_4 = arith.constant 0 : index
    %c0_5 = arith.constant 0 : index
    %8 = vector.load %arg3[%c0_3, %c0_4, %c0_5] : memref<8x2x512xf32, #tpu.memory_space<vmem>>, vector<8x1x512xf32>
    %9 = vector.shape_cast %8 : vector<8x1x512xf32> to vector<8x512xf32>
    %10 = arith.mulf %4, %9 : vector<8x512xf32>
    %cst_6 = arith.constant dense<0.000000e+00> : vector<8xf32>
    %11 = vector.multi_reduction <add>, %10, %cst_6 [1] : vector<8x512xf32> to vector<8xf32>
    %12 = vector.shape_cast %11 : vector<8xf32> to vector<8x1xf32>
    %c0_7 = arith.constant 0 : index
    %c1 = arith.constant 1 : index
    %c0_8 = arith.constant 0 : index
    %13 = vector.load %arg3[%c0_7, %c1, %c0_8] : memref<8x2x512xf32, #tpu.memory_space<vmem>>, vector<8x1x512xf32>
    %14 = vector.shape_cast %13 : vector<8x1x512xf32> to vector<8x512xf32>
    %15 = arith.mulf %4, %14 : vector<8x512xf32>
    %cst_9 = arith.constant dense<0.000000e+00> : vector<8xf32>
    %16 = vector.multi_reduction <add>, %15, %cst_9 [1] : vector<8x512xf32> to vector<8xf32>
    %17 = vector.shape_cast %16 : vector<8xf32> to vector<8x1xf32>
    %c0_10 = arith.constant 0 : index
    %c1_11 = arith.constant 1 : index
    %c0_12 = arith.constant 0 : index
    %18 = vector.load %arg2[%c0_10, %c1_11, %c0_12] : memref<8x3x512xf32, #tpu.memory_space<vmem>>, vector<8x1x512xf32>
    %19 = vector.shape_cast %18 : vector<8x1x512xf32> to vector<8x512xf32>
    %20 = arith.mulf %19, %19 : vector<8x512xf32>
    %cst_13 = arith.constant dense<0.000000e+00> : vector<8xf32>
    %21 = vector.multi_reduction <add>, %20, %cst_13 [1] : vector<8x512xf32> to vector<8xf32>
    %22 = vector.shape_cast %21 : vector<8xf32> to vector<8x1xf32>
    %c0_14 = arith.constant 0 : index
    %c0_15 = arith.constant 0 : index
    %c0_16 = arith.constant 0 : index
    %23 = vector.load %arg3[%c0_14, %c0_15, %c0_16] : memref<8x2x512xf32, #tpu.memory_space<vmem>>, vector<8x1x512xf32>
    %24 = vector.shape_cast %23 : vector<8x1x512xf32> to vector<8x512xf32>
    %25 = arith.mulf %19, %24 : vector<8x512xf32>
    %cst_17 = arith.constant dense<0.000000e+00> : vector<8xf32>
    %26 = vector.multi_reduction <add>, %25, %cst_17 [1] : vector<8x512xf32> to vector<8xf32>
    %27 = vector.shape_cast %26 : vector<8xf32> to vector<8x1xf32>
    %c0_18 = arith.constant 0 : index
    %c1_19 = arith.constant 1 : index
    %c0_20 = arith.constant 0 : index
    %28 = vector.load %arg3[%c0_18, %c1_19, %c0_20] : memref<8x2x512xf32, #tpu.memory_space<vmem>>, vector<8x1x512xf32>
    %29 = vector.shape_cast %28 : vector<8x1x512xf32> to vector<8x512xf32>
    %30 = arith.mulf %19, %29 : vector<8x512xf32>
    %cst_21 = arith.constant dense<0.000000e+00> : vector<8xf32>
    %31 = vector.multi_reduction <add>, %30, %cst_21 [1] : vector<8x512xf32> to vector<8xf32>
    %32 = vector.shape_cast %31 : vector<8xf32> to vector<8x1xf32>
    %c0_22 = arith.constant 0 : index
    %c2 = arith.constant 2 : index
    %c0_23 = arith.constant 0 : index
    %33 = vector.load %arg2[%c0_22, %c2, %c0_23] : memref<8x3x512xf32, #tpu.memory_space<vmem>>, vector<8x1x512xf32>
    %34 = vector.shape_cast %33 : vector<8x1x512xf32> to vector<8x512xf32>
    %35 = arith.mulf %34, %34 : vector<8x512xf32>
    %cst_24 = arith.constant dense<0.000000e+00> : vector<8xf32>
    %36 = vector.multi_reduction <add>, %35, %cst_24 [1] : vector<8x512xf32> to vector<8xf32>
    %37 = vector.shape_cast %36 : vector<8xf32> to vector<8x1xf32>
    %c0_25 = arith.constant 0 : index
    %c0_26 = arith.constant 0 : index
    %c0_27 = arith.constant 0 : index
    %38 = vector.load %arg3[%c0_25, %c0_26, %c0_27] : memref<8x2x512xf32, #tpu.memory_space<vmem>>, vector<8x1x512xf32>
    %39 = vector.shape_cast %38 : vector<8x1x512xf32> to vector<8x512xf32>
    %40 = arith.mulf %34, %39 : vector<8x512xf32>
    %cst_28 = arith.constant dense<0.000000e+00> : vector<8xf32>
    %41 = vector.multi_reduction <add>, %40, %cst_28 [1] : vector<8x512xf32> to vector<8xf32>
    %42 = vector.shape_cast %41 : vector<8xf32> to vector<8x1xf32>
    %c0_29 = arith.constant 0 : index
    %c1_30 = arith.constant 1 : index
    %c0_31 = arith.constant 0 : index
    %43 = vector.load %arg3[%c0_29, %c1_30, %c0_31] : memref<8x2x512xf32, #tpu.memory_space<vmem>>, vector<8x1x512xf32>
    %44 = vector.shape_cast %43 : vector<8x1x512xf32> to vector<8x512xf32>
    %45 = arith.mulf %34, %44 : vector<8x512xf32>
    %cst_32 = arith.constant dense<0.000000e+00> : vector<8xf32>
    %46 = vector.multi_reduction <add>, %45, %cst_32 [1] : vector<8x512xf32> to vector<8xf32>
    %47 = vector.shape_cast %46 : vector<8xf32> to vector<8x1xf32>
    %c0_33 = arith.constant 0 : index
    %c0_34 = arith.constant 0 : index
    %c0_35 = arith.constant 0 : index
    %48 = vector.load %arg3[%c0_33, %c0_34, %c0_35] : memref<8x2x512xf32, #tpu.memory_space<vmem>>, vector<8x1x512xf32>
    %49 = vector.shape_cast %48 : vector<8x1x512xf32> to vector<8x512xf32>
    %50 = arith.mulf %49, %49 : vector<8x512xf32>
    %cst_36 = arith.constant dense<0.000000e+00> : vector<8xf32>
    %51 = vector.multi_reduction <add>, %50, %cst_36 [1] : vector<8x512xf32> to vector<8xf32>
    %52 = vector.shape_cast %51 : vector<8xf32> to vector<8x1xf32>
    %c0_37 = arith.constant 0 : index
    %c1_38 = arith.constant 1 : index
    %c0_39 = arith.constant 0 : index
    %53 = vector.load %arg3[%c0_37, %c1_38, %c0_39] : memref<8x2x512xf32, #tpu.memory_space<vmem>>, vector<8x1x512xf32>
    %54 = vector.shape_cast %53 : vector<8x1x512xf32> to vector<8x512xf32>
    %55 = arith.mulf %54, %54 : vector<8x512xf32>
    %cst_40 = arith.constant dense<0.000000e+00> : vector<8xf32>
    %56 = vector.multi_reduction <add>, %55, %cst_40 [1] : vector<8x512xf32> to vector<8xf32>
    %57 = vector.shape_cast %56 : vector<8xf32> to vector<8x1xf32>
    %c0_41 = arith.constant 0 : index
    %c0_42 = arith.constant 0 : index
    %58 = vector.load %arg5[%c0_41, %c0_42] : memref<8x6xf32, #tpu.memory_space<vmem>>, vector<8x6xf32>
    %59 = tpu.concatenate %12, %17, %27, %32, %42, %47 in 1 : vector<8x1xf32>, vector<8x1xf32>, vector<8x1xf32>, vector<8x1xf32>, vector<8x1xf32>, vector<8x1xf32> -> vector<8x6xf32>
    %60 = arith.addf %58, %59 : vector<8x6xf32>
    %c0_43 = arith.constant 0 : index
    %c0_44 = arith.constant 0 : index
    %61 = vector.load %arg5[%c0_43, %c0_44] : memref<8x6xf32, #tpu.memory_space<vmem>>, vector<8x6xf32>
    tpu.vector_store %arg5[%c0_43, %c0_44], %60 {strides = array<i32>} : memref<8x6xf32, #tpu.memory_space<vmem>>, vector<8x6xf32>,
    %c0_45 = arith.constant 0 : index
    %c0_46 = arith.constant 0 : index
    %62 = vector.load %arg6[%c0_45, %c0_46] : memref<8x3xf32, #tpu.memory_space<vmem>>, vector<8x3xf32>
    %63 = tpu.concatenate %7, %22, %37 in 1 : vector<8x1xf32>, vector<8x1xf32>, vector<8x1xf32> -> vector<8x3xf32>
    %64 = arith.addf %62, %63 : vector<8x3xf32>
    %c0_47 = arith.constant 0 : index
    %c0_48 = arith.constant 0 : index
    %65 = vector.load %arg6[%c0_47, %c0_48] : memref<8x3xf32, #tpu.memory_space<vmem>>, vector<8x3xf32>
    tpu.vector_store %arg6[%c0_47, %c0_48], %64 {strides = array<i32>} : memref<8x3xf32, #tpu.memory_space<vmem>>, vector<8x3xf32>,
    %c0_49 = arith.constant 0 : index
    %c0_50 = arith.constant 0 : index
    %66 = vector.load %arg7[%c0_49, %c0_50] : memref<8x2xf32, #tpu.memory_space<vmem>>, vector<8x2xf32>
    %67 = tpu.concatenate %52, %57 in 1 : vector<8x1xf32>, vector<8x1xf32> -> vector<8x2xf32>
    %68 = arith.addf %66, %67 : vector<8x2xf32>
    %c0_51 = arith.constant 0 : index
    %c0_52 = arith.constant 0 : index
    %69 = vector.load %arg7[%c0_51, %c0_52] : memref<8x2xf32, #tpu.memory_space<vmem>>, vector<8x2xf32>
    tpu.vector_store %arg7[%c0_51, %c0_52], %68 {strides = array<i32>} : memref<8x2xf32, #tpu.memory_space<vmem>>, vector<8x2xf32>,
    %c0_i32_53 = arith.constant 0 : i32
    %70 = arith.cmpi eq, %arg1, %c0_i32_53 : i32
    %71 = arith.extui %70 : i1 to i32
    %c0_i32_54 = arith.constant 0 : i32
    %72 = arith.cmpi ne, %71, %c0_i32_54 : i32
    scf.if %72 {
      %c0_55 = arith.constant 0 : index
      %c0_56 = arith.constant 0 : index
      %73 = vector.load %arg5[%c0_55, %c0_56] : memref<8x6xf32, #tpu.memory_space<vmem>>, vector<8x6xf32>
      %c0_57 = arith.constant 0 : index
      %c0_58 = arith.constant 0 : index
      %74 = vector.load %arg6[%c0_57, %c0_58] : memref<8x3xf32, #tpu.memory_space<vmem>>, vector<8x3xf32>
      %c0_59 = arith.constant 0 : index
      %c0_60 = arith.constant 0 : index
      %75 = vector.load %arg7[%c0_59, %c0_60] : memref<8x2xf32, #tpu.memory_space<vmem>>, vector<8x2xf32>
      %76 = vector.extract_strided_slice %74 {offsets = [0, 0], sizes = [8, 1], strides = [1, 1]} : vector<8x3xf32> to vector<8x1xf32>
      %77 = vector.extract_strided_slice %73 {offsets = [0, 0], sizes = [8, 1], strides = [1, 1]} : vector<8x6xf32> to vector<8x1xf32>
      %78 = vector.extract_strided_slice %75 {offsets = [0, 0], sizes = [8, 1], strides = [1, 1]} : vector<8x2xf32> to vector<8x1xf32>
      %79 = arith.mulf %77, %77 : vector<8x1xf32>
      %80 = arith.mulf %76, %78 : vector<8x1xf32>
      %cst_61 = arith.constant 9.99999971E-10 : f32
      %81 = vector.broadcast %cst_61 : f32 to vector<8x1xf32>
      %82 = arith.addf %80, %81 : vector<8x1xf32>
      %83 = arith.divf %79, %82 : vector<8x1xf32>
      %cst_62 = arith.constant 9.99999971E-10 : f32
      %84 = vector.broadcast %cst_62 : f32 to vector<8x1xf32>
      %85 = arith.addf %83, %84 : vector<8x1xf32>
      %cst_63 = arith.constant 1.000000e+00 : f32
      %86 = vector.broadcast %cst_63 : f32 to vector<8x1xf32>
      %87 = arith.subf %86, %83 : vector<8x1xf32>
      %cst_64 = arith.constant 9.99999971E-10 : f32
      %88 = vector.broadcast %cst_64 : f32 to vector<8x1xf32>
      %89 = arith.addf %87, %88 : vector<8x1xf32>
      %90 = arith.divf %85, %89 : vector<8x1xf32>
      %91 = math.log %90 : vector<8x1xf32>
      %cst_65 = arith.constant 0.434294492 : f32
      %92 = vector.broadcast %cst_65 : f32 to vector<8x1xf32>
      %93 = arith.mulf %91, %92 : vector<8x1xf32>
      %cst_66 = arith.constant 1.000000e+01 : f32
      %94 = vector.broadcast %cst_66 : f32 to vector<8x1xf32>
      %95 = arith.mulf %94, %93 : vector<8x1xf32>
      %96 = vector.extract_strided_slice %73 {offsets = [0, 1], sizes = [8, 1], strides = [1, 1]} : vector<8x6xf32> to vector<8x1xf32>
      %97 = vector.extract_strided_slice %75 {offsets = [0, 1], sizes = [8, 1], strides = [1, 1]} : vector<8x2xf32> to vector<8x1xf32>
      %98 = arith.mulf %96, %96 : vector<8x1xf32>
      %99 = arith.mulf %76, %97 : vector<8x1xf32>
      %cst_67 = arith.constant 9.99999971E-10 : f32
      %100 = vector.broadcast %cst_67 : f32 to vector<8x1xf32>
      %101 = arith.addf %99, %100 : vector<8x1xf32>
      %102 = arith.divf %98, %101 : vector<8x1xf32>
      %cst_68 = arith.constant 9.99999971E-10 : f32
      %103 = vector.broadcast %cst_68 : f32 to vector<8x1xf32>
      %104 = arith.addf %102, %103 : vector<8x1xf32>
      %cst_69 = arith.constant 1.000000e+00 : f32
      %105 = vector.broadcast %cst_69 : f32 to vector<8x1xf32>
      %106 = arith.subf %105, %102 : vector<8x1xf32>
      %cst_70 = arith.constant 9.99999971E-10 : f32
      %107 = vector.broadcast %cst_70 : f32 to vector<8x1xf32>
      %108 = arith.addf %106, %107 : vector<8x1xf32>
      %109 = arith.divf %104, %108 : vector<8x1xf32>
      %110 = math.log %109 : vector<8x1xf32>
      %cst_71 = arith.constant 0.434294492 : f32
      %111 = vector.broadcast %cst_71 : f32 to vector<8x1xf32>
      %112 = arith.mulf %110, %111 : vector<8x1xf32>
      %cst_72 = arith.constant 1.000000e+01 : f32
      %113 = vector.broadcast %cst_72 : f32 to vector<8x1xf32>
      %114 = arith.mulf %113, %112 : vector<8x1xf32>
      %115 = vector.extract_strided_slice %74 {offsets = [0, 1], sizes = [8, 1], strides = [1, 1]} : vector<8x3xf32> to vector<8x1xf32>
      %116 = vector.extract_strided_slice %73 {offsets = [0, 2], sizes = [8, 1], strides = [1, 1]} : vector<8x6xf32> to vector<8x1xf32>
      %117 = vector.extract_strided_slice %75 {offsets = [0, 0], sizes = [8, 1], strides = [1, 1]} : vector<8x2xf32> to vector<8x1xf32>
      %118 = arith.mulf %116, %116 : vector<8x1xf32>
      %119 = arith.mulf %115, %117 : vector<8x1xf32>
      %cst_73 = arith.constant 9.99999971E-10 : f32
      %120 = vector.broadcast %cst_73 : f32 to vector<8x1xf32>
      %121 = arith.addf %119, %120 : vector<8x1xf32>
      %122 = arith.divf %118, %121 : vector<8x1xf32>
      %cst_74 = arith.constant 9.99999971E-10 : f32
      %123 = vector.broadcast %cst_74 : f32 to vector<8x1xf32>
      %124 = arith.addf %122, %123 : vector<8x1xf32>
      %cst_75 = arith.constant 1.000000e+00 : f32
      %125 = vector.broadcast %cst_75 : f32 to vector<8x1xf32>
      %126 = arith.subf %125, %122 : vector<8x1xf32>
      %cst_76 = arith.constant 9.99999971E-10 : f32
      %127 = vector.broadcast %cst_76 : f32 to vector<8x1xf32>
      %128 = arith.addf %126, %127 : vector<8x1xf32>
      %129 = arith.divf %124, %128 : vector<8x1xf32>
      %130 = math.log %129 : vector<8x1xf32>
      %cst_77 = arith.constant 0.434294492 : f32
      %131 = vector.broadcast %cst_77 : f32 to vector<8x1xf32>
      %132 = arith.mulf %130, %131 : vector<8x1xf32>
      %cst_78 = arith.constant 1.000000e+01 : f32
      %133 = vector.broadcast %cst_78 : f32 to vector<8x1xf32>
      %134 = arith.mulf %133, %132 : vector<8x1xf32>
      %135 = vector.extract_strided_slice %73 {offsets = [0, 3], sizes = [8, 1], strides = [1, 1]} : vector<8x6xf32> to vector<8x1xf32>
      %136 = vector.extract_strided_slice %75 {offsets = [0, 1], sizes = [8, 1], strides = [1, 1]} : vector<8x2xf32> to vector<8x1xf32>
      %137 = arith.mulf %135, %135 : vector<8x1xf32>
      %138 = arith.mulf %115, %136 : vector<8x1xf32>
      %cst_79 = arith.constant 9.99999971E-10 : f32
      %139 = vector.broadcast %cst_79 : f32 to vector<8x1xf32>
      %140 = arith.addf %138, %139 : vector<8x1xf32>
      %141 = arith.divf %137, %140 : vector<8x1xf32>
      %cst_80 = arith.constant 9.99999971E-10 : f32
      %142 = vector.broadcast %cst_80 : f32 to vector<8x1xf32>
      %143 = arith.addf %141, %142 : vector<8x1xf32>
      %cst_81 = arith.constant 1.000000e+00 : f32
      %144 = vector.broadcast %cst_81 : f32 to vector<8x1xf32>
      %145 = arith.subf %144, %141 : vector<8x1xf32>
      %cst_82 = arith.constant 9.99999971E-10 : f32
      %146 = vector.broadcast %cst_82 : f32 to vector<8x1xf32>
      %147 = arith.addf %145, %146 : vector<8x1xf32>
      %148 = arith.divf %143, %147 : vector<8x1xf32>
      %149 = math.log %148 : vector<8x1xf32>
      %cst_83 = arith.constant 0.434294492 : f32
      %150 = vector.broadcast %cst_83 : f32 to vector<8x1xf32>
      %151 = arith.mulf %149, %150 : vector<8x1xf32>
      %cst_84 = arith.constant 1.000000e+01 : f32
      %152 = vector.broadcast %cst_84 : f32 to vector<8x1xf32>
      %153 = arith.mulf %152, %151 : vector<8x1xf32>
      %154 = vector.extract_strided_slice %74 {offsets = [0, 2], sizes = [8, 1], strides = [1, 1]} : vector<8x3xf32> to vector<8x1xf32>
      %155 = vector.extract_strided_slice %73 {offsets = [0, 4], sizes = [8, 1], strides = [1, 1]} : vector<8x6xf32> to vector<8x1xf32>
      %156 = vector.extract_strided_slice %75 {offsets = [0, 0], sizes = [8, 1], strides = [1, 1]} : vector<8x2xf32> to vector<8x1xf32>
      %157 = arith.mulf %155, %155 : vector<8x1xf32>
      %158 = arith.mulf %154, %156 : vector<8x1xf32>
      %cst_85 = arith.constant 9.99999971E-10 : f32
      %159 = vector.broadcast %cst_85 : f32 to vector<8x1xf32>
      %160 = arith.addf %158, %159 : vector<8x1xf32>
      %161 = arith.divf %157, %160 : vector<8x1xf32>
      %cst_86 = arith.constant 9.99999971E-10 : f32
      %162 = vector.broadcast %cst_86 : f32 to vector<8x1xf32>
      %163 = arith.addf %161, %162 : vector<8x1xf32>
      %cst_87 = arith.constant 1.000000e+00 : f32
      %164 = vector.broadcast %cst_87 : f32 to vector<8x1xf32>
      %165 = arith.subf %164, %161 : vector<8x1xf32>
      %cst_88 = arith.constant 9.99999971E-10 : f32
      %166 = vector.broadcast %cst_88 : f32 to vector<8x1xf32>
      %167 = arith.addf %165, %166 : vector<8x1xf32>
      %168 = arith.divf %163, %167 : vector<8x1xf32>
      %169 = math.log %168 : vector<8x1xf32>
      %cst_89 = arith.constant 0.434294492 : f32
      %170 = vector.broadcast %cst_89 : f32 to vector<8x1xf32>
      %171 = arith.mulf %169, %170 : vector<8x1xf32>
      %cst_90 = arith.constant 1.000000e+01 : f32
      %172 = vector.broadcast %cst_90 : f32 to vector<8x1xf32>
      %173 = arith.mulf %172, %171 : vector<8x1xf32>
      %174 = vector.extract_strided_slice %73 {offsets = [0, 5], sizes = [8, 1], strides = [1, 1]} : vector<8x6xf32> to vector<8x1xf32>
      %175 = vector.extract_strided_slice %75 {offsets = [0, 1], sizes = [8, 1], strides = [1, 1]} : vector<8x2xf32> to vector<8x1xf32>
      %176 = arith.mulf %174, %174 : vector<8x1xf32>
      %177 = arith.mulf %154, %175 : vector<8x1xf32>
      %cst_91 = arith.constant 9.99999971E-10 : f32
      %178 = vector.broadcast %cst_91 : f32 to vector<8x1xf32>
      %179 = arith.addf %177, %178 : vector<8x1xf32>
      %180 = arith.divf %176, %179 : vector<8x1xf32>
      %cst_92 = arith.constant 9.99999971E-10 : f32
      %181 = vector.broadcast %cst_92 : f32 to vector<8x1xf32>
      %182 = arith.addf %180, %181 : vector<8x1xf32>
      %cst_93 = arith.constant 1.000000e+00 : f32
      %183 = vector.broadcast %cst_93 : f32 to vector<8x1xf32>
      %184 = arith.subf %183, %180 : vector<8x1xf32>
      %cst_94 = arith.constant 9.99999971E-10 : f32
      %185 = vector.broadcast %cst_94 : f32 to vector<8x1xf32>
      %186 = arith.addf %184, %185 : vector<8x1xf32>
      %187 = arith.divf %182, %186 : vector<8x1xf32>
      %188 = math.log %187 : vector<8x1xf32>
      %cst_95 = arith.constant 0.434294492 : f32
      %189 = vector.broadcast %cst_95 : f32 to vector<8x1xf32>
      %190 = arith.mulf %188, %189 : vector<8x1xf32>
      %cst_96 = arith.constant 1.000000e+01 : f32
      %191 = vector.broadcast %cst_96 : f32 to vector<8x1xf32>
      %192 = arith.mulf %191, %190 : vector<8x1xf32>
      %193 = tpu.concatenate %95, %114, %134, %153, %173, %192 in 1 : vector<8x1xf32>, vector<8x1xf32>, vector<8x1xf32>, vector<8x1xf32>, vector<8x1xf32>, vector<8x1xf32> -> vector<8x6xf32>
      %c0_97 = arith.constant 0 : index
      %c0_98 = arith.constant 0 : index
      %194 = vector.load %arg4[%c0_97, %c0_98] : memref<8x6xf32, #tpu.memory_space<vmem>>, vector<8x6xf32>
      tpu.vector_store %arg4[%c0_97, %c0_98], %193 {strides = array<i32>} : memref<8x6xf32, #tpu.memory_space<vmem>>, vector<8x6xf32>,
    } else {
    }
    return
  }
  func.func @transform_0(%arg0: i32, %arg1: i32) -> (i32, i32, i32) {
    %c0_i32 = arith.constant 0 : i32
    %c0_i32_0 = arith.constant 0 : i32
    return %arg0, %c0_i32, %arg1 : i32, i32, i32
  }
  func.func @transform_1(%arg0: i32, %arg1: i32) -> (i32, i32, i32) {
    %c0_i32 = arith.constant 0 : i32
    %c0_i32_0 = arith.constant 0 : i32
    return %arg0, %c0_i32, %arg1 : i32, i32, i32
  }
  func.func @transform_2(%arg0: i32, %arg1: i32) -> (i32, i32) {
    %c0_i32 = arith.constant 0 : i32
    %c0_i32_0 = arith.constant 0 : i32
    return %arg0, %c0_i32 : i32, i32
  }
}

</mosaic_0001>

<llo_original>
// kernel: tpu_custom_call.1
$region0: #{tpu_custom_call.1}
  #allocation0 [shape = 'u32[]', space=smem, size = 0x4, offset = 0x4, fixed_abs, tag = 'smem constant byte address 0x4 - core index']
  #allocation1 [shape = 'u32[72,128]{1,0:T(1,128)}', space=vmem, size = 0x9000, scoped, tag = 'internal scratch']
  #allocation2 [shape = 'f32[8,6]{1,0:T(8,128)}', space=vmem, size = 0x1000, scoped, tag = 'scratch operand']
  #allocation3 [shape = 'f32[8,3]{1,0:T(8,128)}', space=vmem, size = 0x1000, scoped, tag = 'scratch operand']
  #allocation4 [shape = 'f32[8,2]{1,0:T(8,128)}', space=vmem, size = 0x1000, scoped, tag = 'scratch operand']
  #allocation5 [shape = 'f32[8,3]{1,0:T(8,128)}', space=vmem, size = 0x1000, scoped, tag = 'scratch operand']
  #allocation6 [shape = 'f32[8,2]{1,0:T(8,128)}', space=vmem, size = 0x1000, scoped, tag = 'scratch operand']
  %s0 = inlined_call_operand.vmem [shape: f32[8,3,512], index: 0, kind: input, shape index: {}]
  %s1 = inlined_call_operand.vmem [shape: f32[8,2,512], index: 1, kind: input, shape index: {}]
  %s2 = inlined_call_operand.hbm [shape: f32[8,6], index: 2, kind: output, shape index: {}]
  %s3 = sld [smem:[#allocation0]]
  $region26: #{tpu_custom_call.1} parent=0
    _
  %s5 = ssub.s32 1, %s3
  %s6 = scalar_select 0, %s5, %s3
  $region1: #{tpu_custom_call.1} parent=0
    #allocation7 [shape = 'u8[4096]{0}', space=vmem, size = 0x1000, scoped, tag = 'output window, operand 0, single buffered']
    #allocation8 [shape = 's32[1]{0}', space=sflag, size = 0x4, scoped, tag = 'scoped memory for tpu_custom_call.1']
    %7 = vsyncpa [#allocation8], 0
    // Predicated region
    $region2: #{tpu_custom_call.1} parent=1 // pred_check
      _
    $region3: #{tpu_custom_call.1} parent=1 // pred_check_branch
      %9 = sbr.rel (0) target = $region5
    $region4: #{tpu_custom_call.1} parent=1 // pred_region
      _
    $region5: #{tpu_custom_call.1} parent=1 // pred_fallthru
      _
    // Predicated region
    $region6: #{tpu_custom_call.1} parent=1 // pred_check
      _
    $region7: #{tpu_custom_call.1} parent=1 // pred_check_branch
      %11 = sbr.rel (0) target = $region9
    $region8: #{tpu_custom_call.1} parent=1 // pred_region
      _
    $region9: #{tpu_custom_call.1} parent=1 // pred_fallthru
      _
    %p12 = scmp.eq.s32.totalorder 0, 0
    // Predicated region
    $region10: #{tpu_custom_call.1} parent=1 // pred_check
      %p13 = pneg %p12
    $region11: #{tpu_custom_call.1} parent=1 // pred_check_branch
      %15 = sbr.rel (%p13) target = $region13
    $region12: #{tpu_custom_call.1} parent=1 // pred_region
      %vm16 = vcmask 48128
      %17 = vst.msk [vmem:[#allocation2] sm:$0xff] %vm16, 0.0
      %vm18 = vcmask 23552
      %19 = vst.msk [vmem:[#allocation3] sm:$0xff] %vm18, 0.0
      %vm20 = vcmask 15360
      %21 = vst.msk [vmem:[#allocation4] sm:$0xff] %vm20, 0.0
    $region13: #{tpu_custom_call.1} parent=1 // pred_fallthru
      _
    %v22 = vld [vmem:[%s0] ss:$4 sm:$0xf]
    %s23 = scalar_lea.vmem %s0, 16
    %v24 = vld [vmem:[%s23] ss:$4 sm:$0xf]
    %s25 = scalar_lea.vmem %s0, 32
    %v26 = vld [vmem:[%s25] ss:$4 sm:$0xf]
    %s27 = scalar_lea.vmem %s0, 48
    %v28 = vld [vmem:[%s27] ss:$4 sm:$0xf]
    %s29 = scalar_lea.vmem %s0, 64
    %v30 = vld [vmem:[%s29] ss:$4 sm:$0xf]
    %s31 = scalar_lea.vmem %s0, 80
    %v32 = vld [vmem:[%s31] ss:$4 sm:$0xf]
    %s33 = scalar_lea.vmem %s0, 96
    %v34 = vld [vmem:[%s33] ss:$4 sm:$0xf]
    %s35 = scalar_lea.vmem %s0, 112
    %v36 = vld [vmem:[%s35] ss:$4 sm:$0xf]
    %v37 = vmul.f32 %v22, %v22
    %v38 = vmul.f32 %v24, %v24
    %v39 = vmul.f32 %v26, %v26
    %v40 = vmul.f32 %v28, %v28
    %v41 = vmul.f32 %v30, %v30
    %v42 = vmul.f32 %v32, %v32
    %v43 = vmul.f32 %v34, %v34
    %v44 = vmul.f32 %v36, %v36
    %53 = vst [vmem:[#allocation1] ss:$9 sm:$0xff] %v37
    %s54 = scalar_lea.vmem [#allocation1], 1
    %55 = vst [vmem:[%s54] ss:$9 sm:$0xff] %v38
    %s56 = scalar_lea.vmem [#allocation1], 2
    %57 = vst [vmem:[%s56] ss:$9 sm:$0xff] %v39
    %s58 = scalar_lea.vmem [#allocation1], 3
    %59 = vst [vmem:[%s58] ss:$9 sm:$0xff] %v40
    %s60 = scalar_lea.vmem [#allocation1], 4
    %61 = vst [vmem:[%s60] ss:$9 sm:$0xff] %v41
    %s62 = scalar_lea.vmem [#allocation1], 5
    %63 = vst [vmem:[%s62] ss:$9 sm:$0xff] %v42
    %s64 = scalar_lea.vmem [#allocation1], 6
    %65 = vst [vmem:[%s64] ss:$9 sm:$0xff] %v43
    %s66 = scalar_lea.vmem [#allocation1], 7
    %67 = vst [vmem:[%s66] ss:$9 sm:$0xff] %v44
    %v68 = vld [vmem:[#allocation1] sm:$0xff]
    %v69 = vld [vmem:[#allocation1 + $0x9] sm:$0xff]
    %v70 = vld [vmem:[#allocation1 + $0x12] sm:$0xff]
    %v71 = vld [vmem:[#allocation1 + $0x1b] sm:$0xff]
    %v76 = vadd.f32 %v68, %v69
    %v77 = vadd.f32 %v76, %v70
    %v78 = vadd.f32 %v77, %v71
    %79 = vadd.xlane.f32.xlu0 %v78
    %v80 = vpop.xlane.xlu0 %79
    %v81 = vld [vmem:[%s1] ss:$2 sm:$0xf]
    %s82 = scalar_lea.vmem %s1, 8
    %v83 = vld [vmem:[%s82] ss:$2 sm:$0xf]
    %s84 = scalar_lea.vmem %s1, 16
    %v85 = vld [vmem:[%s84] ss:$2 sm:$0xf]
    %s86 = scalar_lea.vmem %s1, 24
    %v87 = vld [vmem:[%s86] ss:$2 sm:$0xf]
    %s88 = scalar_lea.vmem %s1, 32
    %v89 = vld [vmem:[%s88] ss:$2 sm:$0xf]
    %s90 = scalar_lea.vmem %s1, 40
    %v91 = vld [vmem:[%s90] ss:$2 sm:$0xf]
    %s92 = scalar_lea.vmem %s1, 48
    %v93 = vld [vmem:[%s92] ss:$2 sm:$0xf]
    %s94 = scalar_lea.vmem %s1, 56
    %v95 = vld [vmem:[%s94] ss:$2 sm:$0xf]
    %v96 = vmul.f32 %v22, %v81
    %v97 = vmul.f32 %v24, %v83
    %v98 = vmul.f32 %v26, %v85
    %v99 = vmul.f32 %v28, %v87
    %v100 = vmul.f32 %v30, %v89
    %v101 = vmul.f32 %v32, %v91
    %v102 = vmul.f32 %v34, %v93
    %v103 = vmul.f32 %v36, %v95
    %112 = vst [vmem:[#allocation1] ss:$9 sm:$0xff] %v96
    %s113 = scalar_lea.vmem [#allocation1], 1
    %114 = vst [vmem:[%s113] ss:$9 sm:$0xff] %v97
    %s115 = scalar_lea.vmem [#allocation1], 2
    %116 = vst [vmem:[%s115] ss:$9 sm:$0xff] %v98
    %s117 = scalar_lea.vmem [#allocation1], 3
    %118 = vst [vmem:[%s117] ss:$9 sm:$0xff] %v99
    %s119 = scalar_lea.vmem [#allocation1], 4
    %120 = vst [vmem:[%s119] ss:$9 sm:$0xff] %v100
    %s121 = scalar_lea.vmem [#allocation1], 5
    %122 = vst [vmem:[%s121] ss:$9 sm:$0xff] %v101
    %s123 = scalar_lea.vmem [#allocation1], 6
    %124 = vst [vmem:[%s123] ss:$9 sm:$0xff] %v102
    %s125 = scalar_lea.vmem [#allocation1], 7
    %126 = vst [vmem:[%s125] ss:$9 sm:$0xff] %v103
    %v127 = vld [vmem:[#allocation1] sm:$0xff]
    %v128 = vld [vmem:[#allocation1 + $0x9] sm:$0xff]
    %v129 = vld [vmem:[#allocation1 + $0x12] sm:$0xff]
    %v130 = vld [vmem:[#allocation1 + $0x1b] sm:$0xff]
    %v135 = vadd.f32 %v127, %v128
    %v136 = vadd.f32 %v135, %v129
    %v137 = vadd.f32 %v136, %v130
    %138 = vadd.xlane.f32.xlu0 %v137
    %v139 = vpop.xlane.xlu0 %138
    %s140 = scalar_lea.vmem %s1, 1
    %v141 = vld [vmem:[%s140] ss:$2 sm:$0xf]
    %s142 = scalar_lea.vmem %s1, 9
    %v143 = vld [vmem:[%s142] ss:$2 sm:$0xf]
    %s144 = scalar_lea.vmem %s1, 17
    %v145 = vld [vmem:[%s144] ss:$2 sm:$0xf]
    %s146 = scalar_lea.vmem %s1, 25
    %v147 = vld [vmem:[%s146] ss:$2 sm:$0xf]
    %s148 = scalar_lea.vmem %s1, 33
    %v149 = vld [vmem:[%s148] ss:$2 sm:$0xf]
    %s150 = scalar_lea.vmem %s1, 41
    %v151 = vld [vmem:[%s150] ss:$2 sm:$0xf]
    %s152 = scalar_lea.vmem %s1, 49
    %v153 = vld [vmem:[%s152] ss:$2 sm:$0xf]
    %s154 = scalar_lea.vmem %s1, 57
    %v155 = vld [vmem:[%s154] ss:$2 sm:$0xf]
    %v156 = vmul.f32 %v22, %v141
    %v157 = vmul.f32 %v24, %v143
    %v158 = vmul.f32 %v26, %v145
    %v159 = vmul.f32 %v28, %v147
    %v160 = vmul.f32 %v30, %v149
    %v161 = vmul.f32 %v32, %v151
    %v162 = vmul.f32 %v34, %v153
    %v163 = vmul.f32 %v36, %v155
    %172 = vst [vmem:[#allocation1] ss:$9 sm:$0xff] %v156
    %s173 = scalar_lea.vmem [#allocation1], 1
    %174 = vst [vmem:[%s173] ss:$9 sm:$0xff] %v157
    %s175 = scalar_lea.vmem [#allocation1], 2
    %176 = vst [vmem:[%s175] ss:$9 sm:$0xff] %v158
    %s177 = scalar_lea.vmem [#allocation1], 3
    %178 = vst [vmem:[%s177] ss:$9 sm:$0xff] %v159
    %s179 = scalar_lea.vmem [#allocation1], 4
    %180 = vst [vmem:[%s179] ss:$9 sm:$0xff] %v160
    %s181 = scalar_lea.vmem [#allocation1], 5
    %182 = vst [vmem:[%s181] ss:$9 sm:$0xff] %v161
    %s183 = scalar_lea.vmem [#allocation1], 6
    %184 = vst [vmem:[%s183] ss:$9 sm:$0xff] %v162
    %s185 = scalar_lea.vmem [#allocation1], 7
    %186 = vst [vmem:[%s185] ss:$9 sm:$0xff] %v163
    %v187 = vld [vmem:[#allocation1] sm:$0xff]
    %v188 = vld [vmem:[#allocation1 + $0x9] sm:$0xff]
    %v189 = vld [vmem:[#allocation1 + $0x12] sm:$0xff]
    %v190 = vld [vmem:[#allocation1 + $0x1b] sm:$0xff]
    %v195 = vadd.f32 %v187, %v188
    %v196 = vadd.f32 %v195, %v189
    %v197 = vadd.f32 %v196, %v190
    %198 = vadd.xlane.f32.xlu0 %v197
    %v199 = vpop.xlane.xlu0 %198
    %s200 = scalar_lea.vmem %s0, 1
    %v201 = vld [vmem:[%s200] ss:$4 sm:$0xf]
    %s202 = scalar_lea.vmem %s0, 17
    %v203 = vld [vmem:[%s202] ss:$4 sm:$0xf]
    %s204 = scalar_lea.vmem %s0, 33
    %v205 = vld [vmem:[%s204] ss:$4 sm:$0xf]
    %s206 = scalar_lea.vmem %s0, 49
    %v207 = vld [vmem:[%s206] ss:$4 sm:$0xf]
    %s208 = scalar_lea.vmem %s0, 65
    %v209 = vld [vmem:[%s208] ss:$4 sm:$0xf]
    %s210 = scalar_lea.vmem %s0, 81
    %v211 = vld [vmem:[%s210] ss:$4 sm:$0xf]
    %s212 = scalar_lea.vmem %s0, 97
    %v213 = vld [vmem:[%s212] ss:$4 sm:$0xf]
    %s214 = scalar_lea.vmem %s0, 113
    %v215 = vld [vmem:[%s214] ss:$4 sm:$0xf]
    %v216 = vmul.f32 %v201, %v201
    %v217 = vmul.f32 %v203, %v203
    %v218 = vmul.f32 %v205, %v205
    %v219 = vmul.f32 %v207, %v207
    %v220 = vmul.f32 %v209, %v209
    %v221 = vmul.f32 %v211, %v211
    %v222 = vmul.f32 %v213, %v213
    %v223 = vmul.f32 %v215, %v215
    %232 = vst [vmem:[#allocation1] ss:$9 sm:$0xff] %v216
    %s233 = scalar_lea.vmem [#allocation1], 1
    %234 = vst [vmem:[%s233] ss:$9 sm:$0xff] %v217
    %s235 = scalar_lea.vmem [#allocation1], 2
    %236 = vst [vmem:[%s235] ss:$9 sm:$0xff] %v218
    %s237 = scalar_lea.vmem [#allocation1], 3
    %238 = vst [vmem:[%s237] ss:$9 sm:$0xff] %v219
    %s239 = scalar_lea.vmem [#allocation1], 4
    %240 = vst [vmem:[%s239] ss:$9 sm:$0xff] %v220
    %s241 = scalar_lea.vmem [#allocation1], 5
    %242 = vst [vmem:[%s241] ss:$9 sm:$0xff] %v221
    %s243 = scalar_lea.vmem [#allocation1], 6
    %244 = vst [vmem:[%s243] ss:$9 sm:$0xff] %v222
    %s245 = scalar_lea.vmem [#allocation1], 7
    %246 = vst [vmem:[%s245] ss:$9 sm:$0xff] %v223
    %v247 = vld [vmem:[#allocation1] sm:$0xff]
    %v248 = vld [vmem:[#allocation1 + $0x9] sm:$0xff]
    %v249 = vld [vmem:[#allocation1 + $0x12] sm:$0xff]
    %v250 = vld [vmem:[#allocation1 + $0x1b] sm:$0xff]
    %v255 = vadd.f32 %v247, %v248
    %v256 = vadd.f32 %v255, %v249
    %v257 = vadd.f32 %v256, %v250
    %258 = vadd.xlane.f32.xlu0 %v257
    %v259 = vpop.xlane.xlu0 %258
    %v260 = vmul.f32 %v201, %v81
    %v261 = vmul.f32 %v203, %v83
    %v262 = vmul.f32 %v205, %v85
    %v263 = vmul.f32 %v207, %v87
    %v264 = vmul.f32 %v209, %v89
    %v265 = vmul.f32 %v211, %v91
    %v266 = vmul.f32 %v213, %v93
    %v267 = vmul.f32 %v215, %v95
    %276 = vst [vmem:[#allocation1] ss:$9 sm:$0xff] %v260
    %s277 = scalar_lea.vmem [#allocation1], 1
    %278 = vst [vmem:[%s277] ss:$9 sm:$0xff] %v261
    %s279 = scalar_lea.vmem [#allocation1], 2
    %280 = vst [vmem:[%s279] ss:$9 sm:$0xff] %v262
    %s281 = scalar_lea.vmem [#allocation1], 3
    %282 = vst [vmem:[%s281] ss:$9 sm:$0xff] %v263
    %s283 = scalar_lea.vmem [#allocation1], 4
    %284 = vst [vmem:[%s283] ss:$9 sm:$0xff] %v264
    %s285 = scalar_lea.vmem [#allocation1], 5
    %286 = vst [vmem:[%s285] ss:$9 sm:$0xff] %v265
    %s287 = scalar_lea.vmem [#allocation1], 6
    %288 = vst [vmem:[%s287] ss:$9 sm:$0xff] %v266
    %s289 = scalar_lea.vmem [#allocation1], 7
    %290 = vst [vmem:[%s289] ss:$9 sm:$0xff] %v267
    %v291 = vld [vmem:[#allocation1] sm:$0xff]
    %v292 = vld [vmem:[#allocation1 + $0x9] sm:$0xff]
    %v293 = vld [vmem:[#allocation1 + $0x12] sm:$0xff]
    %v294 = vld [vmem:[#allocation1 + $0x1b] sm:$0xff]
    %v299 = vadd.f32 %v291, %v292
    %v300 = vadd.f32 %v299, %v293
    %v301 = vadd.f32 %v300, %v294
    %302 = vadd.xlane.f32.xlu0 %v301
    %v303 = vpop.xlane.xlu0 %302
    %v304 = vmul.f32 %v201, %v141
    %v305 = vmul.f32 %v203, %v143
    %v306 = vmul.f32 %v205, %v145
    %v307 = vmul.f32 %v207, %v147
    %v308 = vmul.f32 %v209, %v149
    %v309 = vmul.f32 %v211, %v151
    %v310 = vmul.f32 %v213, %v153
    %v311 = vmul.f32 %v215, %v155
    %320 = vst [vmem:[#allocation1] ss:$9 sm:$0xff] %v304
    %s321 = scalar_lea.vmem [#allocation1], 1
    %322 = vst [vmem:[%s321] ss:$9 sm:$0xff] %v305
    %s323 = scalar_lea.vmem [#allocation1], 2
    %324 = vst [vmem:[%s323] ss:$9 sm:$0xff] %v306
    %s325 = scalar_lea.vmem [#allocation1], 3
    %326 = vst [vmem:[%s325] ss:$9 sm:$0xff] %v307
    %s327 = scalar_lea.vmem [#allocation1], 4
    %328 = vst [vmem:[%s327] ss:$9 sm:$0xff] %v308
    %s329 = scalar_lea.vmem [#allocation1], 5
    %330 = vst [vmem:[%s329] ss:$9 sm:$0xff] %v309
    %s331 = scalar_lea.vmem [#allocation1], 6
    %332 = vst [vmem:[%s331] ss:$9 sm:$0xff] %v310
    %s333 = scalar_lea.vmem [#allocation1], 7
    %334 = vst [vmem:[%s333] ss:$9 sm:$0xff] %v311
    %v335 = vld [vmem:[#allocation1] sm:$0xff]
    %v336 = vld [vmem:[#allocation1 + $0x9] sm:$0xff]
    %v337 = vld [vmem:[#allocation1 + $0x12] sm:$0xff]
    %v338 = vld [vmem:[#allocation1 + $0x1b] sm:$0xff]
    %v343 = vadd.f32 %v335, %v336
    %v344 = vadd.f32 %v343, %v337
    %v345 = vadd.f32 %v344, %v338
    %346 = vadd.xlane.f32.xlu0 %v345
    %v347 = vpop.xlane.xlu0 %346
    %s348 = scalar_lea.vmem %s0, 2
    %v349 = vld [vmem:[%s348] ss:$4 sm:$0xf]
    %s350 = scalar_lea.vmem %s0, 18
    %v351 = vld [vmem:[%s350] ss:$4 sm:$0xf]
    %s352 = scalar_lea.vmem %s0, 34
    %v353 = vld [vmem:[%s352] ss:$4 sm:$0xf]
    %s354 = scalar_lea.vmem %s0, 50
    %v355 = vld [vmem:[%s354] ss:$4 sm:$0xf]
    %s356 = scalar_lea.vmem %s0, 66
    %v357 = vld [vmem:[%s356] ss:$4 sm:$0xf]
    %s358 = scalar_lea.vmem %s0, 82
    %v359 = vld [vmem:[%s358] ss:$4 sm:$0xf]
    %s360 = scalar_lea.vmem %s0, 98
    %v361 = vld [vmem:[%s360] ss:$4 sm:$0xf]
    %s362 = scalar_lea.vmem %s0, 114
    %v363 = vld [vmem:[%s362] ss:$4 sm:$0xf]
    %v364 = vmul.f32 %v349, %v349
    %v365 = vmul.f32 %v351, %v351
    %v366 = vmul.f32 %v353, %v353
    %v367 = vmul.f32 %v355, %v355
    %v368 = vmul.f32 %v357, %v357
    %v369 = vmul.f32 %v359, %v359
    %v370 = vmul.f32 %v361, %v361
    %v371 = vmul.f32 %v363, %v363
    %380 = vst [vmem:[#allocation1] ss:$9 sm:$0xff] %v364
    %s381 = scalar_lea.vmem [#allocation1], 1
    %382 = vst [vmem:[%s381] ss:$9 sm:$0xff] %v365
    %s383 = scalar_lea.vmem [#allocation1], 2
    %384 = vst [vmem:[%s383] ss:$9 sm:$0xff] %v366
    %s385 = scalar_lea.vmem [#allocation1], 3
    %386 = vst [vmem:[%s385] ss:$9 sm:$0xff] %v367
    %s387 = scalar_lea.vmem [#allocation1], 4
    %388 = vst [vmem:[%s387] ss:$9 sm:$0xff] %v368
    %s389 = scalar_lea.vmem [#allocation1], 5
    %390 = vst [vmem:[%s389] ss:$9 sm:$0xff] %v369
    %s391 = scalar_lea.vmem [#allocation1], 6
    %392 = vst [vmem:[%s391] ss:$9 sm:$0xff] %v370
    %s393 = scalar_lea.vmem [#allocation1], 7
    %394 = vst [vmem:[%s393] ss:$9 sm:$0xff] %v371
    %v395 = vld [vmem:[#allocation1] sm:$0xff]
    %v396 = vld [vmem:[#allocation1 + $0x9] sm:$0xff]
    %v397 = vld [vmem:[#allocation1 + $0x12] sm:$0xff]
    %v398 = vld [vmem:[#allocation1 + $0x1b] sm:$0xff]
    %v403 = vadd.f32 %v395, %v396
    %v404 = vadd.f32 %v403, %v397
    %v405 = vadd.f32 %v404, %v398
    %406 = vadd.xlane.f32.xlu0 %v405
    %v407 = vpop.xlane.xlu0 %406
    %v408 = vmul.f32 %v349, %v81
    %v409 = vmul.f32 %v351, %v83
    %v410 = vmul.f32 %v353, %v85
    %v411 = vmul.f32 %v355, %v87
    %v412 = vmul.f32 %v357, %v89
    %v413 = vmul.f32 %v359, %v91
    %v414 = vmul.f32 %v361, %v93
    %v415 = vmul.f32 %v363, %v95
    %424 = vst [vmem:[#allocation1] ss:$9 sm:$0xff] %v408
    %s425 = scalar_lea.vmem [#allocation1], 1
    %426 = vst [vmem:[%s425] ss:$9 sm:$0xff] %v409
    %s427 = scalar_lea.vmem [#allocation1], 2
    %428 = vst [vmem:[%s427] ss:$9 sm:$0xff] %v410
    %s429 = scalar_lea.vmem [#allocation1], 3
    %430 = vst [vmem:[%s429] ss:$9 sm:$0xff] %v411
    %s431 = scalar_lea.vmem [#allocation1], 4
    %432 = vst [vmem:[%s431] ss:$9 sm:$0xff] %v412
    %s433 = scalar_lea.vmem [#allocation1], 5
    %434 = vst [vmem:[%s433] ss:$9 sm:$0xff] %v413
    %s435 = scalar_lea.vmem [#allocation1], 6
    %436 = vst [vmem:[%s435] ss:$9 sm:$0xff] %v414
    %s437 = scalar_lea.vmem [#allocation1], 7
    %438 = vst [vmem:[%s437] ss:$9 sm:$0xff] %v415
    %v439 = vld [vmem:[#allocation1] sm:$0xff]
    %v440 = vld [vmem:[#allocation1 + $0x9] sm:$0xff]
    %v441 = vld [vmem:[#allocation1 + $0x12] sm:$0xff]
    %v442 = vld [vmem:[#allocation1 + $0x1b] sm:$0xff]
    %v447 = vadd.f32 %v439, %v440
    %v448 = vadd.f32 %v447, %v441
    %v449 = vadd.f32 %v448, %v442
    %450 = vadd.xlane.f32.xlu0 %v449
    %v451 = vpop.xlane.xlu0 %450
    %v452 = vmul.f32 %v349, %v141
    %v453 = vmul.f32 %v351, %v143
    %v454 = vmul.f32 %v353, %v145
    %v455 = vmul.f32 %v355, %v147
    %v456 = vmul.f32 %v357, %v149
    %v457 = vmul.f32 %v359, %v151
    %v458 = vmul.f32 %v361, %v153
    %v459 = vmul.f32 %v363, %v155
    %468 = vst [vmem:[#allocation1] ss:$9 sm:$0xff] %v452
    %s469 = scalar_lea.vmem [#allocation1], 1
    %470 = vst [vmem:[%s469] ss:$9 sm:$0xff] %v453
    %s471 = scalar_lea.vmem [#allocation1], 2
    %472 = vst [vmem:[%s471] ss:$9 sm:$0xff] %v454
    %s473 = scalar_lea.vmem [#allocation1], 3
    %474 = vst [vmem:[%s473] ss:$9 sm:$0xff] %v455
    %s475 = scalar_lea.vmem [#allocation1], 4
    %476 = vst [vmem:[%s475] ss:$9 sm:$0xff] %v456
    %s477 = scalar_lea.vmem [#allocation1], 5
    %478 = vst [vmem:[%s477] ss:$9 sm:$0xff] %v457
    %s479 = scalar_lea.vmem [#allocation1], 6
    %480 = vst [vmem:[%s479] ss:$9 sm:$0xff] %v458
    %s481 = scalar_lea.vmem [#allocation1], 7
    %482 = vst [vmem:[%s481] ss:$9 sm:$0xff] %v459
    %v483 = vld [vmem:[#allocation1] sm:$0xff]
    %v484 = vld [vmem:[#allocation1 + $0x9] sm:$0xff]
    %v485 = vld [vmem:[#allocation1 + $0x12] sm:$0xff]
    %v486 = vld [vmem:[#allocation1 + $0x1b] sm:$0xff]
    %v491 = vadd.f32 %v483, %v484
    %v492 = vadd.f32 %v491, %v485
    %v493 = vadd.f32 %v492, %v486
    %494 = vadd.xlane.f32.xlu0 %v493
    %v495 = vpop.xlane.xlu0 %494
    %v496 = vmul.f32 %v81, %v81
    %v497 = vmul.f32 %v83, %v83
    %v498 = vmul.f32 %v85, %v85
    %v499 = vmul.f32 %v87, %v87
    %v500 = vmul.f32 %v89, %v89
    %v501 = vmul.f32 %v91, %v91
    %v502 = vmul.f32 %v93, %v93
    %v503 = vmul.f32 %v95, %v95
    %512 = vst [vmem:[#allocation1] ss:$9 sm:$0xff] %v496
    %s513 = scalar_lea.vmem [#allocation1], 1
    %514 = vst [vmem:[%s513] ss:$9 sm:$0xff] %v497
    %s515 = scalar_lea.vmem [#allocation1], 2
    %516 = vst [vmem:[%s515] ss:$9 sm:$0xff] %v498
    %s517 = scalar_lea.vmem [#allocation1], 3
    %518 = vst [vmem:[%s517] ss:$9 sm:$0xff] %v499
    %s519 = scalar_lea.vmem [#allocation1], 4
    %520 = vst [vmem:[%s519] ss:$9 sm:$0xff] %v500
    %s521 = scalar_lea.vmem [#allocation1], 5
    %522 = vst [vmem:[%s521] ss:$9 sm:$0xff] %v501
    %s523 = scalar_lea.vmem [#allocation1], 6
    %524 = vst [vmem:[%s523] ss:$9 sm:$0xff] %v502
    %s525 = scalar_lea.vmem [#allocation1], 7
    %526 = vst [vmem:[%s525] ss:$9 sm:$0xff] %v503
    %v527 = vld [vmem:[#allocation1] sm:$0xff]
    %v528 = vld [vmem:[#allocation1 + $0x9] sm:$0xff]
    %v529 = vld [vmem:[#allocation1 + $0x12] sm:$0xff]
    %v530 = vld [vmem:[#allocation1 + $0x1b] sm:$0xff]
    %v535 = vadd.f32 %v527, %v528
    %v536 = vadd.f32 %v535, %v529
    %v537 = vadd.f32 %v536, %v530
    %538 = vadd.xlane.f32.xlu0 %v537
    %v539 = vpop.xlane.xlu0 %538
    %v540 = vmul.f32 %v141, %v141
    %v541 = vmul.f32 %v143, %v143
    %v542 = vmul.f32 %v145, %v145
    %v543 = vmul.f32 %v147, %v147
    %v544 = vmul.f32 %v149, %v149
    %v545 = vmul.f32 %v151, %v151
    %v546 = vmul.f32 %v153, %v153
    %v547 = vmul.f32 %v155, %v155
    %556 = vst [vmem:[#allocation1] ss:$9 sm:$0xff] %v540
    %s557 = scalar_lea.vmem [#allocation1], 1
    %558 = vst [vmem:[%s557] ss:$9 sm:$0xff] %v541
    %s559 = scalar_lea.vmem [#allocation1], 2
    %560 = vst [vmem:[%s559] ss:$9 sm:$0xff] %v542
    %s561 = scalar_lea.vmem [#allocation1], 3
    %562 = vst [vmem:[%s561] ss:$9 sm:$0xff] %v543
    %s563 = scalar_lea.vmem [#allocation1], 4
    %564 = vst [vmem:[%s563] ss:$9 sm:$0xff] %v544
    %s565 = scalar_lea.vmem [#allocation1], 5
    %566 = vst [vmem:[%s565] ss:$9 sm:$0xff] %v545
    %s567 = scalar_lea.vmem [#allocation1], 6
    %568 = vst [vmem:[%s567] ss:$9 sm:$0xff] %v546
    %s569 = scalar_lea.vmem [#allocation1], 7
    %570 = vst [vmem:[%s569] ss:$9 sm:$0xff] %v547
    %v571 = vld [vmem:[#allocation1] sm:$0xff]
    %v572 = vld [vmem:[#allocation1 + $0x9] sm:$0xff]
    %v573 = vld [vmem:[#allocation1 + $0x12] sm:$0xff]
    %v574 = vld [vmem:[#allocation1 + $0x1b] sm:$0xff]
    %v579 = vadd.f32 %v571, %v572
    %v580 = vadd.f32 %v579, %v573
    %v581 = vadd.f32 %v580, %v574
    %582 = vadd.xlane.f32.xlu0 %v581
    %v583 = vpop.xlane.xlu0 %582
    %v584 = vld [vmem:[#allocation2] sm:$0xff]
    %vm585 = vcmask 7168
    %v586 = vsel %vm585, %v139, %v199
    %vm587 = vcmask 15360
    %v588 = vsel %vm587, %v586, %v303
    %vm589 = vcmask 23552
    %v590 = vsel %vm589, %v588, %v347
    %vm591 = vcmask 31744
    %v592 = vsel %vm591, %v590, %v451
    %vm593 = vcmask 39936
    %v594 = vsel %vm593, %v592, %v495
    %v595 = vadd.f32 %v584, %v594
    %vm596 = vcmask 48128
    %597 = vst.msk [vmem:[#allocation2] sm:$0xff] %vm596, %v595
    %v598 = vld [vmem:[#allocation3] sm:$0xff]
    %v599 = vsel %vm585, %v80, %v259
    %v600 = vsel %vm587, %v599, %v407
    %v601 = vadd.f32 %v598, %v600
    %602 = vst.msk [vmem:[#allocation3] sm:$0xff] %vm589, %v601
    %v603 = vld [vmem:[#allocation4] sm:$0xff]
    %v604 = vsel %vm585, %v539, %v583
    %v605 = vadd.f32 %v603, %v604
    %606 = vst.msk [vmem:[#allocation4] sm:$0xff] %vm587, %v605
    // Predicated region
    $region14: #{tpu_custom_call.1} parent=1 // pred_check
      %p607 = pneg %p12
    $region15: #{tpu_custom_call.1} parent=1 // pred_check_branch
      %609 = sbr.rel (%p607) target = $region17
    $region16: #{tpu_custom_call.1} parent=1 // pred_region
      %v610 = vld [vmem:[#allocation2] sm:$0xff]
      %v611 = vld [vmem:[#allocation3] sm:$0xff]
      %v612 = vld [vmem:[#allocation4] sm:$0xff]
      %v613 = vmul.f32 %v610, %v610
      %v614 = vmul.f32 %v611, %v612
      %v615 = vadd.f32 %v614, 1e-09
      %v616 = vrcp.pop %v615
      %v617 = vmul.f32 %v615, %v616
      %v618 = vsub.f32 1.0, %v617
      %v619 = vmul.f32 %v616, %v618
      %v620 = vadd.f32 %v616, %v619
      %vm621 = vweird.f32 %v615
      %vm622 = vweird.f32 %v616
      %vm623 = vmor %vm621, %vm622
      %v624 = vsel %vm623, %v616, %v620
      %v625 = vand.u32 2147483647, %v615
      %vm626 = vcmp.eq.f32.partialorder %v625, 8.507059e+37
      %v627 = vand.u32 %v615, 2147483648
      %v628 = vor.u32 1.1754944e-38, %v627
      %v629 = vsel %vm626, %v628, %v624
      %v630 = vmul.f32 %v613, %v629
      %v631 = vadd.f32 %v630, 1e-09
      %v632 = vsub.f32 1.0, %v630
      %v633 = vadd.f32 %v632, 1e-09
      %v634 = vrcp.pop %v633
      %v635 = vmul.f32 %v633, %v634
      %v636 = vsub.f32 1.0, %v635
      %v637 = vmul.f32 %v634, %v636
      %v638 = vadd.f32 %v634, %v637
      %vm639 = vweird.f32 %v633
      %vm640 = vweird.f32 %v634
      %vm641 = vmor %vm639, %vm640
      %v642 = vsel %vm641, %v634, %v638
      %v643 = vand.u32 2147483647, %v633
      %vm644 = vcmp.eq.f32.partialorder %v643, 8.507059e+37
      %v645 = vand.u32 %v633, 2147483648
      %v646 = vor.u32 1.1754944e-38, %v645
      %v647 = vsel %vm644, %v646, %v642
      %v648 = vmul.f32 %v631, %v647
      %v649 = vlog2.pop %v648
      %v650 = vmul.f32 %v649, 0.6931472
      %v651 = vmul.f32 %v650, 0.4342945
      %v652 = vmul.f32 %v651, 10.0
      %654 = vrot.lane.b32.xlu0 %v612, 127
      %v655 = vpop.permute.xlu0 %654
      %v657 = vmul.f32 %v611, %v655
      %v658 = vadd.f32 %v657, 1e-09
      %660 = vrot.lane.b32.xlu0 %v658, 1
      %v661 = vpop.permute.xlu0 %660
      %v663 = vrcp.pop %v661
      %v664 = vmul.f32 %v661, %v663
      %v665 = vsub.f32 1.0, %v664
      %v666 = vmul.f32 %v663, %v665
      %v667 = vadd.f32 %v663, %v666
      %vm668 = vweird.f32 %v661
      %vm669 = vweird.f32 %v663
      %vm670 = vmor %vm668, %vm669
      %v671 = vsel %vm670, %v663, %v667
      %v672 = vand.u32 2147483647, %v661
      %vm673 = vcmp.eq.f32.partialorder %v672, 8.507059e+37
      %v674 = vand.u32 %v661, 2147483648
      %v675 = vor.u32 1.1754944e-38, %v674
      %v676 = vsel %vm673, %v675, %v671
      %v677 = vmul.f32 %v613, %v676
      %v678 = vadd.f32 %v677, 1e-09
      %v679 = vsub.f32 1.0, %v677
      %v680 = vadd.f32 %v679, 1e-09
      %v681 = vrcp.pop %v680
      %v682 = vmul.f32 %v680, %v681
      %v683 = vsub.f32 1.0, %v682
      %v684 = vmul.f32 %v681, %v683
      %v685 = vadd.f32 %v681, %v684
      %vm686 = vweird.f32 %v680
      %vm687 = vweird.f32 %v681
      %vm688 = vmor %vm686, %vm687
      %v689 = vsel %vm688, %v681, %v685
      %v690 = vand.u32 2147483647, %v680
      %vm691 = vcmp.eq.f32.partialorder %v690, 8.507059e+37
      %v692 = vand.u32 %v680, 2147483648
      %v693 = vor.u32 1.1754944e-38, %v692
      %v694 = vsel %vm691, %v693, %v689
      %v695 = vmul.f32 %v678, %v694
      %v696 = vlog2.pop %v695
      %v697 = vmul.f32 %v696, 0.6931472
      %v698 = vmul.f32 %v697, 0.4342945
      %v699 = vmul.f32 %v698, 10.0
      %700 = vrot.lane.b32.xlu0 %v612, 1
      %v701 = vpop.permute.xlu0 %700
      %v703 = vmul.f32 %v611, %v701
      %v704 = vadd.f32 %v703, 1e-09
      %706 = vrot.lane.b32.xlu0 %v704, 1
      %v707 = vpop.permute.xlu0 %706
      %v709 = vrcp.pop %v707
      %v710 = vmul.f32 %v707, %v709
      %v711 = vsub.f32 1.0, %v710
      %v712 = vmul.f32 %v709, %v711
      %v713 = vadd.f32 %v709, %v712
      %vm714 = vweird.f32 %v707
      %vm715 = vweird.f32 %v709
      %vm716 = vmor %vm714, %vm715
      %v717 = vsel %vm716, %v709, %v713
      %v718 = vand.u32 2147483647, %v707
      %vm719 = vcmp.eq.f32.partialorder %v718, 8.507059e+37
      %v720 = vand.u32 %v707, 2147483648
      %v721 = vor.u32 1.1754944e-38, %v720
      %v722 = vsel %vm719, %v721, %v717
      %v723 = vmul.f32 %v613, %v722
      %v724 = vadd.f32 %v723, 1e-09
      %v725 = vsub.f32 1.0, %v723
      %v726 = vadd.f32 %v725, 1e-09
      %v727 = vrcp.pop %v726
      %v728 = vmul.f32 %v726, %v727
      %v729 = vsub.f32 1.0, %v728
      %v730 = vmul.f32 %v727, %v729
      %v731 = vadd.f32 %v727, %v730
      %vm732 = vweird.f32 %v726
      %vm733 = vweird.f32 %v727
      %vm734 = vmor %vm732, %vm733
      %v735 = vsel %vm734, %v727, %v731
      %v736 = vand.u32 2147483647, %v726
      %vm737 = vcmp.eq.f32.partialorder %v736, 8.507059e+37
      %v738 = vand.u32 %v726, 2147483648
      %v739 = vor.u32 1.1754944e-38, %v738
      %v740 = vsel %vm737, %v739, %v735
      %v741 = vmul.f32 %v724, %v740
      %v742 = vlog2.pop %v741
      %v743 = vmul.f32 %v742, 0.6931472
      %v744 = vmul.f32 %v743, 0.4342945
      %v745 = vmul.f32 %v744, 10.0
      %747 = vrot.lane.b32.xlu0 %v615, 2
      %v748 = vpop.permute.xlu0 %747
      %v750 = vrcp.pop %v748
      %v751 = vmul.f32 %v748, %v750
      %v752 = vsub.f32 1.0, %v751
      %v753 = vmul.f32 %v750, %v752
      %v754 = vadd.f32 %v750, %v753
      %vm755 = vweird.f32 %v748
      %vm756 = vweird.f32 %v750
      %vm757 = vmor %vm755, %vm756
      %v758 = vsel %vm757, %v750, %v754
      %v759 = vand.u32 2147483647, %v748
      %vm760 = vcmp.eq.f32.partialorder %v759, 8.507059e+37
      %v761 = vand.u32 %v748, 2147483648
      %v762 = vor.u32 1.1754944e-38, %v761
      %v763 = vsel %vm760, %v762, %v758
      %v764 = vmul.f32 %v613, %v763
      %v765 = vadd.f32 %v764, 1e-09
      %v766 = vsub.f32 1.0, %v764
      %v767 = vadd.f32 %v766, 1e-09
      %v768 = vrcp.pop %v767
      %v769 = vmul.f32 %v767, %v768
      %v770 = vsub.f32 1.0, %v769
      %v771 = vmul.f32 %v768, %v770
      %v772 = vadd.f32 %v768, %v771
      %vm773 = vweird.f32 %v767
      %vm774 = vweird.f32 %v768
      %vm775 = vmor %vm773, %vm774
      %v776 = vsel %vm775, %v768, %v772
      %v777 = vand.u32 2147483647, %v767
      %vm778 = vcmp.eq.f32.partialorder %v777, 8.507059e+37
      %v779 = vand.u32 %v767, 2147483648
      %v780 = vor.u32 1.1754944e-38, %v779
      %v781 = vsel %vm778, %v780, %v776
      %v782 = vmul.f32 %v765, %v781
      %v783 = vlog2.pop %v782
      %v784 = vmul.f32 %v783, 0.6931472
      %v785 = vmul.f32 %v784, 0.4342945
      %v786 = vmul.f32 %v785, 10.0
      %787 = vrot.lane.b32.xlu0 %v612, 2
      %v788 = vpop.permute.xlu0 %787
      %v790 = vmul.f32 %v611, %v788
      %v791 = vadd.f32 %v790, 1e-09
      %793 = vrot.lane.b32.xlu0 %v791, 2
      %v794 = vpop.permute.xlu0 %793
      %v796 = vrcp.pop %v794
      %v797 = vmul.f32 %v794, %v796
      %v798 = vsub.f32 1.0, %v797
      %v799 = vmul.f32 %v796, %v798
      %v800 = vadd.f32 %v796, %v799
      %vm801 = vweird.f32 %v794
      %vm802 = vweird.f32 %v796
      %vm803 = vmor %vm801, %vm802
      %v804 = vsel %vm803, %v796, %v800
      %v805 = vand.u32 2147483647, %v794
      %vm806 = vcmp.eq.f32.partialorder %v805, 8.507059e+37
      %v807 = vand.u32 %v794, 2147483648
      %v808 = vor.u32 1.1754944e-38, %v807
      %v809 = vsel %vm806, %v808, %v804
      %v810 = vmul.f32 %v613, %v809
      %v811 = vadd.f32 %v810, 1e-09
      %v812 = vsub.f32 1.0, %v810
      %v813 = vadd.f32 %v812, 1e-09
      %v814 = vrcp.pop %v813
      %v815 = vmul.f32 %v813, %v814
      %v816 = vsub.f32 1.0, %v815
      %v817 = vmul.f32 %v814, %v816
      %v818 = vadd.f32 %v814, %v817
      %vm819 = vweird.f32 %v813
      %vm820 = vweird.f32 %v814
      %vm821 = vmor %vm819, %vm820
      %v822 = vsel %vm821, %v814, %v818
      %v823 = vand.u32 2147483647, %v813
      %vm824 = vcmp.eq.f32.partialorder %v823, 8.507059e+37
      %v825 = vand.u32 %v813, 2147483648
      %v826 = vor.u32 1.1754944e-38, %v825
      %v827 = vsel %vm824, %v826, %v822
      %v828 = vmul.f32 %v811, %v827
      %v829 = vlog2.pop %v828
      %v830 = vmul.f32 %v829, 0.6931472
      %v831 = vmul.f32 %v830, 0.4342945
      %v832 = vmul.f32 %v831, 10.0
      %833 = vrot.lane.b32.xlu0 %v704, 3
      %v834 = vpop.permute.xlu0 %833
      %v836 = vrcp.pop %v834
      %v837 = vmul.f32 %v834, %v836
      %v838 = vsub.f32 1.0, %v837
      %v839 = vmul.f32 %v836, %v838
      %v840 = vadd.f32 %v836, %v839
      %vm841 = vweird.f32 %v834
      %vm842 = vweird.f32 %v836
      %vm843 = vmor %vm841, %vm842
      %v844 = vsel %vm843, %v836, %v840
      %v845 = vand.u32 2147483647, %v834
      %vm846 = vcmp.eq.f32.partialorder %v845, 8.507059e+37
      %v847 = vand.u32 %v834, 2147483648
      %v848 = vor.u32 1.1754944e-38, %v847
      %v849 = vsel %vm846, %v848, %v844
      %v850 = vmul.f32 %v613, %v849
      %v851 = vadd.f32 %v850, 1e-09
      %v852 = vsub.f32 1.0, %v850
      %v853 = vadd.f32 %v852, 1e-09
      %v854 = vrcp.pop %v853
      %v855 = vmul.f32 %v853, %v854
      %v856 = vsub.f32 1.0, %v855
      %v857 = vmul.f32 %v854, %v856
      %v858 = vadd.f32 %v854, %v857
      %vm859 = vweird.f32 %v853
      %vm860 = vweird.f32 %v854
      %vm861 = vmor %vm859, %vm860
      %v862 = vsel %vm861, %v854, %v858
      %v863 = vand.u32 2147483647, %v853
      %vm864 = vcmp.eq.f32.partialorder %v863, 8.507059e+37
      %v865 = vand.u32 %v853, 2147483648
      %v866 = vor.u32 1.1754944e-38, %v865
      %v867 = vsel %vm864, %v866, %v862
      %v868 = vmul.f32 %v851, %v867
      %v869 = vlog2.pop %v868
      %v870 = vmul.f32 %v869, 0.6931472
      %v871 = vmul.f32 %v870, 0.4342945
      %v872 = vmul.f32 %v871, 10.0
      %v873 = vsel %vm585, %v652, %v699
      %v874 = vsel %vm587, %v873, %v745
      %v875 = vsel %vm589, %v874, %v786
      %v876 = vsel %vm591, %v875, %v832
      %v877 = vsel %vm593, %v876, %v872
      %878 = vst.msk [vmem:[#allocation7] sm:$0xff] %vm596, %v877
    $region17: #{tpu_custom_call.1} parent=1 // pred_fallthru
      _
    // Predicated region
    $region18: #{tpu_custom_call.1} parent=1 // pred_check
      _
    $region19: #{tpu_custom_call.1} parent=1 // pred_check_branch
      %880 = sbr.rel (0) target = $region21
    $region20: #{tpu_custom_call.1} parent=1 // pred_region
      %882 = vsyncadd [#allocation8], 0
      %s884 = sshll.u32 [#allocation7], 4
      %s885 = int_to_ptr.vmem [resolvable:$true] %s884
      %s886 = sshll.u32 %s2, 4
      %s887 = int_to_ptr.hbm [resolvable:$true] %s886
      %889 = dma.vmem_to_hbm [thread:$0]  %s885, 128, %s887, [#allocation8]
    $region21: #{tpu_custom_call.1} parent=1 // pred_fallthru
      _
    // Predicated region
    $region22: #{tpu_custom_call.1} parent=1 // pred_check
      _
    $region23: #{tpu_custom_call.1} parent=1 // pred_check_branch
      %891 = sbr.rel (0) target = $region25
    $region24: #{tpu_custom_call.1} parent=1 // pred_region
      %893 = dma.done [#allocation8], 128
    $region25: #{tpu_custom_call.1} parent=1 // pred_fallthru
      _
    %894 = vsyncpa [#allocation8], 1

</llo_original>
